<compile_context>
chip_gen: v7x
topology: tpu7x:2x2x1
jax: 0.10.0
libtpu: 0.0.40
codegen_flags: <defaults>
</compile_context>

<pallas_src>
import numpy as np
import jax
import jax.numpy as jnp
from jax.experimental import pallas as pl
from jax.experimental.pallas import tpu as pltpu


# ------------------------- line atomic data (spectral_line=8542) ------------
def line_params(cw=8542):
    assert cw == 8542
    j1, j2, g1, g2 = 2.5, 1.5, 1.2, 1.33
    cw_val = 8542.091
    d = j1 * (j1 + 1.0) - j2 * (j2 + 1.0)
    geff = 0.5 * (g1 + g2) + 0.25 * (g1 - g2) * d
    ss = j1 * (j1 + 1.0) + j2 * (j2 + 1.0)
    gd = g1 - g2
    Gg = geff * geff - 0.0125 * gd * gd * (16.0 * ss - 7.0 * d * d - 4.0)
    return cw_val, geff, Gg


# ------------------------- cder (numpy, precompute glue) ---------------------
def cder(x, y):
    """Centered derivative of Stokes I. x: (nlam,), y: (ny,nx,ns,nlam)."""
    ny, nx, nstokes, nlam = y.shape
    yp = np.zeros((ny, nx, nlam), dtype='float32')
    odx = x[1] - x[0]
    body = (y[:, :, 0, 1] - y[:, :, 0, 0]) / odx
    yp[:, :, 0] = body
    for ii in range(1, nlam - 1):
        dx = x[ii + 1] - x[ii]
        dy = (y[:, :, 0, ii + 1] - y[:, :, 0, ii]) / dx
        yp[:, :, ii] = (odx * dy + dx * body) / (dx + odx)
        odx = dx
        body = dy
    yp[:, :, -1] = body
    return yp


def _round_up(n, m):
    return ((n + m - 1) // m) * m


def _round_down(n, m):
    return max(m, (n // m) * m)


# ------------------------- Pallas kernel -------------------------------------
def _make_wfa_kernel(cV_vnorm, qunorm):
    """Lane-dense layout (pixel axis = lane axis).

      sclq_ref   : (nWav, 1)       per-wavelength scale, PRE-multiplied by
                                   0.75*C^2*Gg at init.
      params_ref : (3, tile_N)     rows = [Blos, BQ, BU] (un-normalized)
      didw_ref   : (nWav, tile_N)  dI/dw
      out_ref    : (3, nWav, tile_N) stacked [Q, U, V]
    """

    def kernel(sclq_ref, params_ref, didw_ref, out_ref):
        didw = didw_ref[...]                           # (nWav, tile_N)
        p = params_ref[...]                            # (3, tile_N)
        blos = p[0:1, :] * cV_vnorm                    # (1, tile_N) sublane bcast
        bq = p[1:2, :] * qunorm
        bu = p[2:3, :] * qunorm
        clp = sclq_ref[...] * didw                     # (nWav, tile_N) in-kernel
        out_ref[0, :, :] = clp * bq                    # stokesQ
        out_ref[1, :, :] = clp * bu                    # stokesU
        out_ref[2, :, :] = blos * didw                 # stokesV

    return kernel


# ------------------------- model (plain JAX / numpy glue) --------------------
class WFAModel3DPallas:
    def __init__(self, data, wl, vdop=0.035, spectral_line=8542, tile_lanes=32768):
        # data: (ny, nx, nStokes, nWav) numpy float32
        # wl:   (nWav,) Angstroms relative to line center
        cw, geff, Gg = line_params(spectral_line)
        self.geff, self.Gg = geff, Gg
        self.C = -4.67e-13 * cw ** 2
        self.Vnorm = 1.0
        self.QUnorm = 1000.0

        ny, nx, ns, nw = data.shape
        self.N = ny * nx
        self.nWav = nw

        dIdw = cder(wl, data).reshape(self.N, nw).astype(np.float32)   # (N, nWav)
        scl = (1.0 / (wl + 1e-9)).astype(np.float32)
        scl[np.abs(wl) <= vdop] = 0.0

        # reference copies (pixel-major, same layout as the torch module)
        self.dIdw = jnp.asarray(dIdw)
        self.dIdwscl = jnp.asarray(dIdw * scl[None, :])

        # ---- tiling: lane-dense, pixel axis LAST ---------------------------
        # Pad pixels only to a multiple of 128 lanes (waste <= 127 pixels).
        self.Npad = _round_up(self.N, 128)
        # User tile rounded DOWN to a multiple of 128, clamped to the problem.
        tile = _round_down(min(int(tile_lanes), self.Npad), 128)
        # Ensure >= 2 grid steps when possible so v7x's 2nd TensorCore works.
        if self.Npad // tile < 2 and self.Npad >= 256:
            tile = _round_up((self.Npad + 1) // 2, 128)
        self.tile = tile
        nsteps = pl.cdiv(self.Npad, tile)   # Pallas masks the partial last block

        didw_t = np.zeros((nw, self.Npad), dtype=np.float32)
        didw_t[:, :self.N] = dIdw.T
        self.dIdw_T = jnp.asarray(didw_t)                         # (nWav, Npad)
        # Fold 0.75*C^2*Gg into the per-wavelength scale column.
        cQU = float(0.75 * self.C ** 2 * self.Gg)
        self.sclq_col = jnp.asarray((cQU * scl).reshape(nw, 1))   # (nWav, 1)

        cV_vnorm = float(self.C * self.geff * self.Vnorm)
        kernel = _make_wfa_kernel(cV_vnorm, float(self.QUnorm))

        N, Npad = self.N, self.Npad
        bytes_accessed = 4 * (nw * Npad + 3 * Npad + nsteps * nw   # reads
                              + 3 * nw * Npad)                     # writes
        call = pl.pallas_call(
            kernel,
            out_shape=jax.ShapeDtypeStruct((3, nw, Npad), jnp.float32),
            grid=(nsteps,),
            in_specs=[
                pl.BlockSpec((nw, 1), lambda i: (0, 0)),      # scl (tiny, reused)
                pl.BlockSpec((3, tile), lambda i: (0, i)),    # params (lane-dense)
                pl.BlockSpec((nw, tile), lambda i: (0, i)),   # dIdw (lane-dense)
            ],
            out_specs=pl.BlockSpec((3, nw, tile), lambda i: (0, 0, i)),
            compiler_params=pltpu.CompilerParams(
                dimension_semantics=("parallel",)),           # megacore / v7x 2-TC
            cost_estimate=pl.CostEstimate(
                flops=8 * nw * Npad, transcendentals=0,
                bytes_accessed=bytes_accessed),
        )
        self._call = call

        # ---- jitted end-to-end forward: prologue + kernel + ONE relayout ---
        @jax.jit
        def _fwd(params, sclq_col, dIdw_T):
            params_t = jnp.transpose(params)                  # (3, N) - tiny
            if Npad != N:
                params_t = jnp.pad(params_t, ((0, 0), (0, Npad - N)))
            out = call(sclq_col, params_t, dIdw_T)            # (3, nWav, Npad)
            # single fused relayout back to [pixel, wavelength] convention
            outT = jnp.transpose(out[:, :, :N], (0, 2, 1))    # (3, N, nWav)
            return outT[0], outT[1], outT[2]

        @jax.jit
        def _fwd_lane_dense(params, sclq_col, dIdw_T):
            params_t = jnp.transpose(params)
            if Npad != N:
                params_t = jnp.pad(params_t, ((0, 0), (0, Npad - N)))
            return call(sclq_col, params_t, dIdw_T)[:, :, :N]  # (3, nWav, N)

        self._fwd = _fwd
        self._fwd_lane_dense = _fwd_lane_dense

    def forward(self, params):
        """params: (N, 3). Returns (stokesQ, stokesU, stokesV), each (N, nWav)."""
        return self._fwd(params, self.sclq_col, self.dIdw_T)

    def forward_lane_dense(self, params):
        """Zero-relayout path: returns stacked (3, nWav, N) = [Q, U, V]."""
        return self._fwd_lane_dense(params, self.sclq_col, self.dIdw_T)

    def forward_ref(self, params):
        blos = params[:, 0:1] * self.Vnorm
        bq = params[:, 1:2] * self.QUnorm
        bu = params[:, 2:3] * self.QUnorm
        v = self.C * self.geff * blos * self.dIdw
        clp = 0.75 * self.C ** 2 * self.Gg * self.dIdwscl
        return clp * bq, clp * bu, v


if __name__ == "__main__":
    key = jax.random.PRNGKey(0)
    ny, nx, ns, nw = 8, 8, 4, 8            # N = 64 pixels, 8 wavelengths
    k1, k2 = jax.random.split(key)

    data = np.asarray(jax.random.normal(k1, (ny, nx, ns, nw)), dtype=np.float32)
    wl = np.linspace(-0.4, 0.4, nw).astype(np.float32)

    model = WFAModel3DPallas(data, wl)

    N = ny * nx
    params = jax.random.normal(k2, (N, 3), dtype=jnp.float32)

    q, u, v = model.forward(params)
    jax.block_until_ready((q, u, v))

    # correctness check against plain-JAX reference
    q_r, u_r, v_r = model.forward_ref(params)
    np.testing.assert_allclose(np.asarray(q), np.asarray(q_r), rtol=1e-5, atol=1e-6)
    np.testing.assert_allclose(np.asarray(u), np.asarray(u_r), rtol=1e-5, atol=1e-6)
    np.testing.assert_allclose(np.asarray(v), np.asarray(v_r), rtol=1e-5, atol=1e-6)

    # lane-dense path check (no relayout)
    quv = model.forward_lane_dense(params)
    jax.block_until_ready(quv)
    np.testing.assert_allclose(np.asarray(quv[2]).T, np.asarray(v_r), rtol=1e-5, atol=1e-6)

    print("KERNEL_OK")
</pallas_src>

<mosaic_0001>
module attributes {stable_mosaic.version = 11 : i64} {
  func.func @kernel(%arg0: i32, %arg1: memref<8x1xf32, #tpu.memory_space<vmem>>, %arg2: memref<3x128xf32, #tpu.memory_space<vmem>>, %arg3: memref<8x128xf32, #tpu.memory_space<vmem>>, %arg4: memref<3x8x128xf32, #tpu.memory_space<vmem>>) attributes {dimension_semantics = [#tpu.dimension_semantics<parallel>], iteration_bounds = array<i64: 1>, scalar_prefetch = 0 : i64, scratch_operands = 0 : i64, tpu.core_type = #tpu.core_type<tc>, window_params = [{pipeline_mode = #tpu.pipeline_mode<synchronous>, transform_indices = @transform_0, window_bounds = array<i64: 8, 1>}, {transform_indices = @transform_1, window_bounds = array<i64: 3, 128>}, {transform_indices = @transform_2, window_bounds = array<i64: 8, 128>}, {transform_indices = @transform_3, window_bounds = array<i64: 3, 8, 128>}]} {
    %c0 = arith.constant 0 : index
    %c0_0 = arith.constant 0 : index
    %0 = vector.load %arg3[%c0, %c0_0] : memref<8x128xf32, #tpu.memory_space<vmem>>, vector<8x128xf32>
    %c0_1 = arith.constant 0 : index
    %c0_2 = arith.constant 0 : index
    %1 = vector.load %arg2[%c0_1, %c0_2] : memref<3x128xf32, #tpu.memory_space<vmem>>, vector<3x128xf32>
    %2 = vector.extract_strided_slice %1 {offsets = [0, 0], sizes = [1, 128], strides = [1, 1]} : vector<3x128xf32> to vector<1x128xf32>
    %cst = arith.constant -3.756850e-05 : f32
    %3 = vector.broadcast %cst : f32 to vector<1x128xf32>
    %4 = arith.mulf %2, %3 : vector<1x128xf32>
    %5 = vector.extract_strided_slice %1 {offsets = [1, 0], sizes = [1, 128], strides = [1, 1]} : vector<3x128xf32> to vector<1x128xf32>
    %cst_3 = arith.constant 1.000000e+03 : f32
    %6 = vector.broadcast %cst_3 : f32 to vector<1x128xf32>
    %7 = arith.mulf %5, %6 : vector<1x128xf32>
    %8 = vector.extract_strided_slice %1 {offsets = [2, 0], sizes = [1, 128], strides = [1, 1]} : vector<3x128xf32> to vector<1x128xf32>
    %cst_4 = arith.constant 1.000000e+03 : f32
    %9 = vector.broadcast %cst_4 : f32 to vector<1x128xf32>
    %10 = arith.mulf %8, %9 : vector<1x128xf32>
    %c0_5 = arith.constant 0 : index
    %c0_6 = arith.constant 0 : index
    %11 = vector.load %arg1[%c0_5, %c0_6] : memref<8x1xf32, #tpu.memory_space<vmem>>, vector<8x1xf32>
    %12 = vector.broadcast %11 : vector<8x1xf32> to vector<8x128xf32>
    %13 = arith.mulf %12, %0 : vector<8x128xf32>
    %14 = vector.broadcast %7 : vector<1x128xf32> to vector<8x128xf32>
    %15 = arith.mulf %13, %14 : vector<8x128xf32>
    %c0_7 = arith.constant 0 : index
    %c0_8 = arith.constant 0 : index
    %c0_9 = arith.constant 0 : index
    %16 = vector.load %arg4[%c0_7, %c0_8, %c0_9] : memref<3x8x128xf32, #tpu.memory_space<vmem>>, vector<1x8x128xf32>
    %17 = vector.shape_cast %16 : vector<1x8x128xf32> to vector<8x128xf32>
    %18 = vector.shape_cast %15 : vector<8x128xf32> to vector<1x8x128xf32>
    tpu.vector_store %arg4[%c0_7, %c0_8, %c0_9], %18 {strides = array<i32>} : memref<3x8x128xf32, #tpu.memory_space<vmem>>, vector<1x8x128xf32>,
    %19 = vector.broadcast %10 : vector<1x128xf32> to vector<8x128xf32>
    %20 = arith.mulf %13, %19 : vector<8x128xf32>
    %c1 = arith.constant 1 : index
    %c0_10 = arith.constant 0 : index
    %c0_11 = arith.constant 0 : index
    %21 = vector.load %arg4[%c1, %c0_10, %c0_11] : memref<3x8x128xf32, #tpu.memory_space<vmem>>, vector<1x8x128xf32>
    %22 = vector.shape_cast %21 : vector<1x8x128xf32> to vector<8x128xf32>
    %23 = vector.shape_cast %20 : vector<8x128xf32> to vector<1x8x128xf32>
    tpu.vector_store %arg4[%c1, %c0_10, %c0_11], %23 {strides = array<i32>} : memref<3x8x128xf32, #tpu.memory_space<vmem>>, vector<1x8x128xf32>,
    %24 = vector.broadcast %4 : vector<1x128xf32> to vector<8x128xf32>
    %25 = arith.mulf %24, %0 : vector<8x128xf32>
    %c2 = arith.constant 2 : index
    %c0_12 = arith.constant 0 : index
    %c0_13 = arith.constant 0 : index
    %26 = vector.load %arg4[%c2, %c0_12, %c0_13] : memref<3x8x128xf32, #tpu.memory_space<vmem>>, vector<1x8x128xf32>
    %27 = vector.shape_cast %26 : vector<1x8x128xf32> to vector<8x128xf32>
    %28 = vector.shape_cast %25 : vector<8x128xf32> to vector<1x8x128xf32>
    tpu.vector_store %arg4[%c2, %c0_12, %c0_13], %28 {strides = array<i32>} : memref<3x8x128xf32, #tpu.memory_space<vmem>>, vector<1x8x128xf32>,
    return
  }
  func.func @transform_0(%arg0: i32) -> (i32, i32) {
    %c0_i32 = arith.constant 0 : i32
    %c0_i32_0 = arith.constant 0 : i32
    %c0_i32_1 = arith.constant 0 : i32
    return %c0_i32, %c0_i32_0 : i32, i32
  }
  func.func @transform_1(%arg0: i32) -> (i32, i32) {
    %c0_i32 = arith.constant 0 : i32
    %c0_i32_0 = arith.constant 0 : i32
    return %c0_i32, %arg0 : i32, i32
  }
  func.func @transform_2(%arg0: i32) -> (i32, i32) {
    %c0_i32 = arith.constant 0 : i32
    %c0_i32_0 = arith.constant 0 : i32
    return %c0_i32, %arg0 : i32, i32
  }
  func.func @transform_3(%arg0: i32) -> (i32, i32, i32) {
    %c0_i32 = arith.constant 0 : i32
    %c0_i32_0 = arith.constant 0 : i32
    %c0_i32_1 = arith.constant 0 : i32
    return %c0_i32, %c0_i32_0, %arg0 : i32, i32, i32
  }
}

</mosaic_0001>

<llo_original>
// kernel: _fwd.1
$region0: #{_fwd.1}
  #allocation0 [shape = 'u32[]', space=smem, size = 0x4, offset = 0x4, fixed_abs, tag = 'smem constant byte address 0x4 - core index']
  #allocation1 [shape = 'u32[144,128]{1,0:T(1,128)}', space=vmem, size = 0x12000, scoped, tag = 'internal scratch']
  %s0 = inlined_call_operand.vmem [shape: f32[8,1], index: 0, kind: input, shape index: {}]
  %s1 = inlined_call_operand.vmem [shape: f32[3,128], index: 1, kind: input, shape index: {}]
  %s2 = inlined_call_operand.vmem [shape: f32[8,128], index: 2, kind: input, shape index: {}]
  %s3 = inlined_call_operand.vmem [shape: f32[3,8,128], index: 3, kind: output, shape index: {}]
  %s4 = sld [smem:[#allocation0]]
  $region22: #{_fwd.1} parent=0
    _
  %s6 = ssub.s32 1, %s4
  %s7 = scalar_select 0, %s6, %s4
  // Predicated region
  $region2: #{_fwd.1} parent=0 // pred_check
    _
  $region3: #{_fwd.1} parent=0 // pred_check_branch
    %9 = sbr.rel (0) target = $region5
  $region4: #{_fwd.1} parent=0 // pred_region
    _
  $region5: #{_fwd.1} parent=0 // pred_fallthru
    _
  // Predicated region
  $region6: #{_fwd.1} parent=0 // pred_check
    _
  $region7: #{_fwd.1} parent=0 // pred_check_branch
    %11 = sbr.rel (0) target = $region9
  $region8: #{_fwd.1} parent=0 // pred_region
    _
  $region9: #{_fwd.1} parent=0 // pred_fallthru
    _
  // Predicated region
  $region10: #{_fwd.1} parent=0 // pred_check
    _
  $region11: #{_fwd.1} parent=0 // pred_check_branch
    %13 = sbr.rel (0) target = $region13
  $region12: #{_fwd.1} parent=0 // pred_region
    _
  $region13: #{_fwd.1} parent=0 // pred_fallthru
    _
  %v14 = vld [vmem:[%s2] sm:$0xff]
  %v15 = vld [vmem:[%s1] sm:$0x7]
  %v16 = vmul.f32 %v15, -3.75685e-05
  %v17 = vmul.f32 %v15, 1000.0
  %v18 = vld [vmem:[%s0] sm:$0xff]
  %20 = vset.pattern.permute.xlu0 0
  %21 = vperm.xlu0 %20, %v18
  %v22 = vpop.permute.xlu0 %21
  %v24 = vmul.f32 %v22, %v14
  %v25 = vlaneseq
  %v26 = vshrl.u32 %v25, 7
  %v27 = vsub.s32 1, %v26
  %v28 = vrot.slane %v17, %v27
  %v29 = vmul.f32 %v24, %v28
  %30 = vst [vmem:[%s3] sm:$0xff] %v29
  %v31 = vlaneseq
  %v32 = vshrl.u32 %v31, 7
  %v33 = vsub.s32 2, %v32
  %v34 = vrot.slane %v17, %v33
  %v35 = vmul.f32 %v24, %v34
  %s36 = scalar_lea.vmem %s3, 8
  %37 = vst [vmem:[%s36] sm:$0xff] %v35
  %v38 = vlaneseq
  %v39 = vshrl.u32 %v38, 7
  %v40 = vsub.s32 0, %v39
  %v41 = vrot.slane %v16, %v40
  %v42 = vmul.f32 %v41, %v14
  %s43 = scalar_lea.vmem %s3, 16
  %44 = vst [vmem:[%s43] sm:$0xff] %v42
  // Predicated region
  $region14: #{_fwd.1} parent=0 // pred_check
    _
  $region15: #{_fwd.1} parent=0 // pred_check_branch
    %46 = sbr.rel (0) target = $region17
  $region16: #{_fwd.1} parent=0 // pred_region
    _
  $region17: #{_fwd.1} parent=0 // pred_fallthru
    _
  // Predicated region
  $region18: #{_fwd.1} parent=0 // pred_check
    _
  $region19: #{_fwd.1} parent=0 // pred_check_branch
    %48 = sbr.rel (0) target = $region21
  $region20: #{_fwd.1} parent=0 // pred_region
    _
  $region21: #{_fwd.1} parent=0 // pred_fallthru
    _

</llo_original>
